<compile_context>
chip_gen: v6e
topology: v6e:2x2x1
jax: 0.10.0
libtpu: 0.0.40
codegen_flags: <defaults>
</compile_context>

<pallas_src>
import functools

import jax
import jax.numpy as jnp
import numpy as np
from jax.experimental import pallas as pl
from jax.experimental.pallas import tpu as pltpu


SMOKE_LAYERS = 10
ENV_LAYERS = 30
MAX_VAL = 5.0


# ----------------------------------------------------------------------------
# Glue: bilinear interpolation with align_corners=True (matches F.interpolate)
# ----------------------------------------------------------------------------
def bilinear_align_corners(x, size):
    B, C, H, W = x.shape
    oh, ow = size
    if (H, W) == (oh, ow):
        return x
    ys = jnp.linspace(0.0, H - 1.0, oh) if oh > 1 else jnp.zeros((oh,), jnp.float32)
    xs = jnp.linspace(0.0, W - 1.0, ow) if ow > 1 else jnp.zeros((ow,), jnp.float32)
    y0 = jnp.floor(ys).astype(jnp.int32)
    y1 = jnp.clip(y0 + 1, 0, H - 1)
    wy = (ys - y0.astype(jnp.float32))[None, None, :, None]
    x0 = jnp.floor(xs).astype(jnp.int32)
    x1 = jnp.clip(x0 + 1, 0, W - 1)
    wx = (xs - x0.astype(jnp.float32))[None, None, None, :]

    row0 = x[:, :, y0, :]
    row1 = x[:, :, y1, :]

    def hmix(r):
        return r[:, :, :, x0] * (1.0 - wx) + r[:, :, :, x1] * wx

    top = hmix(row0)
    bot = hmix(row1)
    return top * (1.0 - wy) + bot * wy


# ----------------------------------------------------------------------------
# Pallas kernel: per-batch SpecifyLayersLoss partial sums, deferred reduction
# ----------------------------------------------------------------------------
def _spec_layers_kernel(fi_ref, ff_ref, fb_ref, a_ref, out_ref,
                        acc_fi_ref, acc_fb_ref, acc_sse_ref, acc_m_ref,
                        *, hw, thw, csel):
    h = pl.program_id(1)

    @pl.when(h == 0)
    def _init():
        acc_fi_ref[...] = jnp.zeros_like(acc_fi_ref)
        acc_fb_ref[...] = jnp.zeros_like(acc_fb_ref)
        acc_sse_ref[...] = jnp.zeros_like(acc_sse_ref)
        acc_m_ref[...] = jnp.zeros_like(acc_m_ref)

    fi = fi_ref[...].astype(jnp.float32)       # (C, thw) — HW lane-dense
    ff = ff_ref[...].astype(jnp.float32)
    fb = fb_ref[...].astype(jnp.float32)
    a = a_ref[...].astype(jnp.float32)         # (1, thw)

    # In-kernel ragged-tail handling (static: zero cost when thw divides HW).
    if hw % thw != 0:
        lane = jax.lax.broadcasted_iota(jnp.int32, (1, thw), 1)
        valid = (h * thw + lane) < hw          # (1, thw) bool
    else:
        valid = None

    sel = a >= 0.1                             # (1, thw) bool
    if valid is not None:
        sel = jnp.logical_and(sel, valid)

    # Only channels < ENV_LAYERS feed s1..s4 — accumulate just those.
    # (jnp.where, not mul-by-mask: OOB tail lanes may hold garbage/NaN.)
    acc_fi_ref[...] += jnp.where(sel, fi[:csel, :], 0.0)
    acc_fb_ref[...] += jnp.where(sel, fb[:csel, :], 0.0)
    acc_m_ref[...] += sel.astype(jnp.float32)

    comp = fi - (ff + fb * (1.0 - a))
    sq = comp * comp
    if valid is not None:
        sq = jnp.where(valid, sq, 0.0)
    # Per-step channel reduction (XLU) -> (1, thw): drops a full-tile acc vld/vst.
    acc_sse_ref[...] += jnp.sum(sq, axis=0, keepdims=True)

    @pl.when(h == pl.num_programs(1) - 1)
    def _finalize():
        acc_fi = acc_fi_ref[...]
        acc_fb = acc_fb_ref[...]
        cidx = jax.lax.broadcasted_iota(jnp.int32, acc_fi.shape, 0)
        smoke = (cidx < SMOKE_LAYERS).astype(jnp.float32)
        env = jnp.logical_and(cidx >= SMOKE_LAYERS,
                              cidx < ENV_LAYERS).astype(jnp.float32)
        s1 = jnp.sum(acc_fi * smoke)           # smoke_in_smoke numerator
        s2 = jnp.sum(acc_fb * smoke)           # env_in_smoke numerator
        s3 = jnp.sum(acc_fi * env)             # smoke_in_env numerator
        s4 = jnp.sum(acc_fb * env)             # env_in_env numerator
        msum = jnp.sum(acc_m_ref[...])
        sse = jnp.sum(acc_sse_ref[...])
        lane_o = jax.lax.broadcasted_iota(jnp.int32, (1, 8), 1)
        out = (jnp.where(lane_o == 0, s1, 0.0)
               + jnp.where(lane_o == 1, s2, 0.0)
               + jnp.where(lane_o == 2, s3, 0.0)
               + jnp.where(lane_o == 3, s4, 0.0)
               + jnp.where(lane_o == 4, msum, 0.0)
               + jnp.where(lane_o == 5, sse, 0.0))
        out_ref[...] = out


def _round_up(x, m):
    return ((x + m - 1) // m) * m


def _vmem_budget_bytes():
    # Generation-aware budgets: v5e/v6e have 128 MiB VMEM, v7x only 64 MiB.
    try:
        cap = int(getattr(pltpu.get_tpu_info(), "vmem_capacity_bytes",
                          64 * 1024 * 1024))
    except Exception:
        cap = 64 * 1024 * 1024
    if cap >= 100 * 1024 * 1024:               # v5e / v6e
        return 48 * 1024 * 1024, 64 * 1024 * 1024
    return 24 * 1024 * 1024, 36 * 1024 * 1024  # v7x (64 MiB physical)


def _pick_hw_tile(hw, c, csel, budget_bytes, limit_bytes):
    # Footprint per spatial lane (f32 bytes):
    #   double-buffered inputs: 2 * (3*C + 1)
    #   resident accumulators : 2 * csel + 2
    bytes_per_lane = 4 * (2 * (3 * c + 1) + 2 * csel + 2)
    max_thw = (budget_bytes // bytes_per_lane) // 128 * 128
    max_thw = max(128, min(8192, max_thw))
    hw128 = _round_up(hw, 128)
    thw = hw128 if hw128 <= max_thw else max_thw
    assert bytes_per_lane * thw <= limit_bytes, (
        "VMEM footprint exceeds per-generation limit; reduce C or tile size")
    return thw


# ----------------------------------------------------------------------------
# Wrapper: full three_part_loss forward
# ----------------------------------------------------------------------------
@functools.partial(jax.jit, static_argnames=("weights",))
def three_part_loss_forward(pred, alpha, mask, F_I, F_F, F_B,
                            weights=(0.1, 0.0, 1.0)):
    B, C, H, W = F_I.shape
    HW = H * W
    CSEL = min(C, _round_up(ENV_LAYERS, 8))    # 32 for the real C=128 model

    # --- SpecifyLayersLoss ---------------------------------------------------
    a_up = bilinear_align_corners(alpha, (H, W)).reshape(B, 1, HW)

    # Free reshape of NCHW (no transpose / no pad / no extra HBM pass).
    fi = F_I.reshape(B, C, HW)
    ff = F_F.reshape(B, C, HW)
    fb = F_B.reshape(B, C, HW)

    budget, vmem_limit = _vmem_budget_bytes()
    thw = _pick_hw_tile(HW, C, CSEL, budget, vmem_limit)
    n_hw = pl.cdiv(HW, thw)

    kernel = functools.partial(_spec_layers_kernel, hw=HW, thw=thw, csel=CSEL)
    feat_spec = pl.BlockSpec((None, C, thw), lambda b, h: (b, 0, h))
    alpha_spec = pl.BlockSpec((None, 1, thw), lambda b, h: (b, 0, h))

    sums = pl.pallas_call(
        kernel,
        out_shape=jax.ShapeDtypeStruct((B, 1, 8), jnp.float32),
        grid=(B, n_hw),
        in_specs=[feat_spec, feat_spec, feat_spec, alpha_spec],
        out_specs=pl.BlockSpec((None, 1, 8), lambda b, h: (b, 0, 0)),
        scratch_shapes=[
            pltpu.VMEM((CSEL, thw), jnp.float32),  # acc F_I*mask (used channels)
            pltpu.VMEM((CSEL, thw), jnp.float32),  # acc F_B*mask (used channels)
            pltpu.VMEM((1, thw), jnp.float32),     # acc compose residual^2
            pltpu.VMEM((1, thw), jnp.float32),     # acc mask count
        ],
        compiler_params=pltpu.CompilerParams(
            dimension_semantics=("parallel", "arbitrary"),
            vmem_limit_bytes=vmem_limit),
    )(fi, ff, fb, a_up)

    # Tiny per-batch partials -> global sums (lets v7x split B across both TCs).
    s1 = jnp.sum(sums[:, 0, 0])
    s2 = jnp.sum(sums[:, 0, 1])
    s3 = jnp.sum(sums[:, 0, 2])
    s4 = jnp.sum(sums[:, 0, 3])
    msum = jnp.sum(sums[:, 0, 4])
    sse = jnp.sum(sums[:, 0, 5])

    safe_msum = jnp.where(msum > 0, msum, 1.0)
    orth_when_valid = (jax.nn.relu(MAX_VAL - s1 / safe_msum)
                       + s2 / safe_msum
                       + s3 / safe_msum
                       + jax.nn.relu(MAX_VAL - s4 / safe_msum))
    Orthogonal_loss = jnp.where(msum > 0, orth_when_valid, 0.0)
    compose_loss = sse / jnp.float32(B * C * H * W)

    # --- AlphaLoss (tiny; left to XLA fusion) --------------------------------
    regress_loss = jnp.mean(jnp.abs(jax.nn.sigmoid(pred) - alpha) * mask)

    # --- weighted total ------------------------------------------------------
    losses = (Orthogonal_loss, compose_loss, regress_loss)
    loss = sum(w * v for w, v in zip(weights, losses)) / sum(weights)
    return loss, Orthogonal_loss, compose_loss, regress_loss


# ----------------------------------------------------------------------------
# Pure-JAX reference (mirrors the PyTorch forward exactly)
# ----------------------------------------------------------------------------
def ref_forward(pred, alpha, mask, F_I, F_F, F_B, weights=(0.1, 0.0, 1.0)):
    a = bilinear_align_corners(alpha, F_I.shape[-2:])
    m = jnp.where(a < 0.1, 0.0, 1.0)
    msum = m.sum()
    safe = jnp.where(msum > 0, msum, 1.0)
    s1 = (F_I[:, :SMOKE_LAYERS] * m).sum()
    s2 = (F_B[:, :SMOKE_LAYERS] * m).sum()
    s3 = (F_I[:, SMOKE_LAYERS:ENV_LAYERS] * m).sum()
    s4 = (F_B[:, SMOKE_LAYERS:ENV_LAYERS] * m).sum()
    orth = jnp.where(
        msum > 0,
        jax.nn.relu(MAX_VAL - s1 / safe) + s2 / safe + s3 / safe
        + jax.nn.relu(MAX_VAL - s4 / safe),
        0.0)
    comp = jnp.mean(jnp.square(F_I - (F_F + F_B * (1.0 - a))))
    reg = jnp.mean(jnp.abs(jax.nn.sigmoid(pred) - alpha) * mask)
    losses = (orth, comp, reg)
    loss = sum(w * v for w, v in zip(weights, losses)) / sum(weights)
    return loss, orth, comp, reg


def _run_case(key, B, C, H, W, Ha, Wa):
    k0, k1, k2, k3, k4, k5 = jax.random.split(key, 6)
    F_I = jax.random.normal(k0, (B, C, H, W), jnp.float32)
    F_F = jax.random.normal(k1, (B, C, H, W), jnp.float32)
    F_B = jax.random.normal(k2, (B, C, H, W), jnp.float32)
    alpha = jax.random.uniform(k3, (B, 1, Ha, Wa), jnp.float32)
    pred = jax.random.normal(k4, (B, 1, Ha, Wa), jnp.float32)
    mask = (jax.random.uniform(k5, (B, 1, Ha, Wa)) > 0.5).astype(jnp.float32)

    out = three_part_loss_forward(pred, alpha, mask, F_I, F_F, F_B)
    out = jax.block_until_ready(out)

    ref = ref_forward(pred, alpha, mask, F_I, F_F, F_B)
    for got, want in zip(out, ref):
        np.testing.assert_allclose(np.asarray(got), np.asarray(want),
                                   rtol=1e-4, atol=1e-4)


if __name__ == "__main__":
    key = jax.random.PRNGKey(0)
    k_a, k_b = jax.random.split(key)

    # Aligned spatial axis (H*W multiple of 128). C >= ENV_LAYERS=30.
    _run_case(k_a, B=2, C=32, H=16, W=16, Ha=8, Wa=8)
    # Ragged spatial axis (H*W = 100): exercises the in-kernel tail masking.
    _run_case(k_b, B=2, C=32, H=10, W=10, Ha=5, Wa=5)

    print("KERNEL_OK")
</pallas_src>

<mosaic_0001>
module attributes {stable_mosaic.version = 11 : i64} {
  func.func @_spec_layers_kernel(%arg0: i32, %arg1: i32, %arg2: memref<1x32x256xf32, #tpu.memory_space<vmem>>, %arg3: memref<1x32x256xf32, #tpu.memory_space<vmem>>, %arg4: memref<1x32x256xf32, #tpu.memory_space<vmem>>, %arg5: memref<1x1x256xf32, #tpu.memory_space<vmem>>, %arg6: memref<1x1x8xf32, #tpu.memory_space<vmem>>, %arg7: memref<32x256xf32, #tpu.memory_space<vmem>>, %arg8: memref<32x256xf32, #tpu.memory_space<vmem>>, %arg9: memref<1x256xf32, #tpu.memory_space<vmem>>, %arg10: memref<1x256xf32, #tpu.memory_space<vmem>>) attributes {dimension_semantics = [#tpu.dimension_semantics<parallel>, #tpu.dimension_semantics<arbitrary>], iteration_bounds = array<i64: 2, 1>, scalar_prefetch = 0 : i64, scratch_operands = 4 : i64, tpu.core_type = #tpu.core_type<tc>, window_params = [{transform_indices = @transform_0, window_bounds = array<i64: 1, 32, 256>}, {transform_indices = @transform_1, window_bounds = array<i64: 1, 32, 256>}, {transform_indices = @transform_2, window_bounds = array<i64: 1, 32, 256>}, {transform_indices = @transform_3, window_bounds = array<i64: 1, 1, 256>}, {transform_indices = @transform_4, window_bounds = array<i64: 1, 1, 8>}]} {
    %c0_i32 = arith.constant 0 : i32
    %0 = arith.cmpi eq, %arg1, %c0_i32 : i32
    %1 = arith.extui %0 : i1 to i32
    %c0_i32_0 = arith.constant 0 : i32
    %2 = arith.cmpi ne, %1, %c0_i32_0 : i32
    scf.if %2 {
      %cst_34 = arith.constant 0.000000e+00 : f32
      %47 = vector.broadcast %cst_34 : f32 to vector<32x256xf32>
      %c0_35 = arith.constant 0 : index
      %c0_36 = arith.constant 0 : index
      %48 = vector.load %arg7[%c0_35, %c0_36] : memref<32x256xf32, #tpu.memory_space<vmem>>, vector<32x256xf32>
      tpu.vector_store %arg7[%c0_35, %c0_36], %47 {strides = array<i32>} : memref<32x256xf32, #tpu.memory_space<vmem>>, vector<32x256xf32>,
      %cst_37 = arith.constant 0.000000e+00 : f32
      %49 = vector.broadcast %cst_37 : f32 to vector<32x256xf32>
      %c0_38 = arith.constant 0 : index
      %c0_39 = arith.constant 0 : index
      %50 = vector.load %arg8[%c0_38, %c0_39] : memref<32x256xf32, #tpu.memory_space<vmem>>, vector<32x256xf32>
      tpu.vector_store %arg8[%c0_38, %c0_39], %49 {strides = array<i32>} : memref<32x256xf32, #tpu.memory_space<vmem>>, vector<32x256xf32>,
      %cst_40 = arith.constant 0.000000e+00 : f32
      %51 = vector.broadcast %cst_40 : f32 to vector<1x256xf32>
      %c0_41 = arith.constant 0 : index
      %c0_42 = arith.constant 0 : index
      %52 = vector.load %arg9[%c0_41, %c0_42] : memref<1x256xf32, #tpu.memory_space<vmem>>, vector<1x256xf32>
      tpu.vector_store %arg9[%c0_41, %c0_42], %51 {strides = array<i32>} : memref<1x256xf32, #tpu.memory_space<vmem>>, vector<1x256xf32>,
      %cst_43 = arith.constant 0.000000e+00 : f32
      %53 = vector.broadcast %cst_43 : f32 to vector<1x256xf32>
      %c0_44 = arith.constant 0 : index
      %c0_45 = arith.constant 0 : index
      %54 = vector.load %arg10[%c0_44, %c0_45] : memref<1x256xf32, #tpu.memory_space<vmem>>, vector<1x256xf32>
      tpu.vector_store %arg10[%c0_44, %c0_45], %53 {strides = array<i32>} : memref<1x256xf32, #tpu.memory_space<vmem>>, vector<1x256xf32>,
    } else {
    }
    %c0 = arith.constant 0 : index
    %c0_1 = arith.constant 0 : index
    %c0_2 = arith.constant 0 : index
    %3 = vector.load %arg2[%c0, %c0_1, %c0_2] : memref<1x32x256xf32, #tpu.memory_space<vmem>>, vector<1x32x256xf32>
    %4 = vector.shape_cast %3 : vector<1x32x256xf32> to vector<32x256xf32>
    %c0_3 = arith.constant 0 : index
    %c0_4 = arith.constant 0 : index
    %c0_5 = arith.constant 0 : index
    %5 = vector.load %arg3[%c0_3, %c0_4, %c0_5] : memref<1x32x256xf32, #tpu.memory_space<vmem>>, vector<1x32x256xf32>
    %6 = vector.shape_cast %5 : vector<1x32x256xf32> to vector<32x256xf32>
    %c0_6 = arith.constant 0 : index
    %c0_7 = arith.constant 0 : index
    %c0_8 = arith.constant 0 : index
    %7 = vector.load %arg4[%c0_6, %c0_7, %c0_8] : memref<1x32x256xf32, #tpu.memory_space<vmem>>, vector<1x32x256xf32>
    %8 = vector.shape_cast %7 : vector<1x32x256xf32> to vector<32x256xf32>
    %c0_9 = arith.constant 0 : index
    %c0_10 = arith.constant 0 : index
    %c0_11 = arith.constant 0 : index
    %9 = vector.load %arg5[%c0_9, %c0_10, %c0_11] : memref<1x1x256xf32, #tpu.memory_space<vmem>>, vector<1x1x256xf32>
    %10 = vector.shape_cast %9 : vector<1x1x256xf32> to vector<1x256xf32>
    %cst = arith.constant 1.000000e-01 : f32
    %11 = vector.broadcast %cst : f32 to vector<1x256xf32>
    %12 = arith.cmpf oge, %10, %11 : vector<1x256xf32>
    %c0_12 = arith.constant 0 : index
    %c0_13 = arith.constant 0 : index
    %13 = vector.load %arg7[%c0_12, %c0_13] : memref<32x256xf32, #tpu.memory_space<vmem>>, vector<32x256xf32>
    %cst_14 = arith.constant 0.000000e+00 : f32
    %14 = vector.shape_cast %12 : vector<1x256xi1> to vector<1x256xi1>
    %15 = vector.broadcast %14 : vector<1x256xi1> to vector<32x256xi1>
    %16 = vector.broadcast %cst_14 : f32 to vector<32x256xf32>
    %17 = arith.select %15, %4, %16 : vector<32x256xi1>, vector<32x256xf32>
    %18 = arith.addf %13, %17 : vector<32x256xf32>
    %c0_15 = arith.constant 0 : index
    %c0_16 = arith.constant 0 : index
    %19 = vector.load %arg7[%c0_15, %c0_16] : memref<32x256xf32, #tpu.memory_space<vmem>>, vector<32x256xf32>
    tpu.vector_store %arg7[%c0_15, %c0_16], %18 {strides = array<i32>} : memref<32x256xf32, #tpu.memory_space<vmem>>, vector<32x256xf32>,
    %c0_17 = arith.constant 0 : index
    %c0_18 = arith.constant 0 : index
    %20 = vector.load %arg8[%c0_17, %c0_18] : memref<32x256xf32, #tpu.memory_space<vmem>>, vector<32x256xf32>
    %cst_19 = arith.constant 0.000000e+00 : f32
    %21 = vector.shape_cast %12 : vector<1x256xi1> to vector<1x256xi1>
    %22 = vector.broadcast %21 : vector<1x256xi1> to vector<32x256xi1>
    %23 = vector.broadcast %cst_19 : f32 to vector<32x256xf32>
    %24 = arith.select %22, %8, %23 : vector<32x256xi1>, vector<32x256xf32>
    %25 = arith.addf %20, %24 : vector<32x256xf32>
    %c0_20 = arith.constant 0 : index
    %c0_21 = arith.constant 0 : index
    %26 = vector.load %arg8[%c0_20, %c0_21] : memref<32x256xf32, #tpu.memory_space<vmem>>, vector<32x256xf32>
    tpu.vector_store %arg8[%c0_20, %c0_21], %25 {strides = array<i32>} : memref<32x256xf32, #tpu.memory_space<vmem>>, vector<32x256xf32>,
    %c0_22 = arith.constant 0 : index
    %c0_23 = arith.constant 0 : index
    %27 = vector.load %arg10[%c0_22, %c0_23] : memref<1x256xf32, #tpu.memory_space<vmem>>, vector<1x256xf32>
    %28 = arith.extui %12 : vector<1x256xi1> to vector<1x256xi32>
    %29 = arith.sitofp %28 : vector<1x256xi32> to vector<1x256xf32>
    %30 = arith.addf %27, %29 : vector<1x256xf32>
    %c0_24 = arith.constant 0 : index
    %c0_25 = arith.constant 0 : index
    %31 = vector.load %arg10[%c0_24, %c0_25] : memref<1x256xf32, #tpu.memory_space<vmem>>, vector<1x256xf32>
    tpu.vector_store %arg10[%c0_24, %c0_25], %30 {strides = array<i32>} : memref<1x256xf32, #tpu.memory_space<vmem>>, vector<1x256xf32>,
    %cst_26 = arith.constant 1.000000e+00 : f32
    %32 = vector.broadcast %cst_26 : f32 to vector<1x256xf32>
    %33 = arith.subf %32, %10 : vector<1x256xf32>
    %34 = vector.broadcast %33 : vector<1x256xf32> to vector<32x256xf32>
    %35 = arith.mulf %8, %34 : vector<32x256xf32>
    %36 = arith.addf %6, %35 : vector<32x256xf32>
    %37 = arith.subf %4, %36 : vector<32x256xf32>
    %38 = arith.mulf %37, %37 : vector<32x256xf32>
    %c0_27 = arith.constant 0 : index
    %c0_28 = arith.constant 0 : index
    %39 = vector.load %arg9[%c0_27, %c0_28] : memref<1x256xf32, #tpu.memory_space<vmem>>, vector<1x256xf32>
    %cst_29 = arith.constant dense<0.000000e+00> : vector<256xf32>
    %40 = vector.multi_reduction <add>, %38, %cst_29 [0] : vector<32x256xf32> to vector<256xf32>
    %41 = vector.shape_cast %40 : vector<256xf32> to vector<1x256xf32>
    %42 = arith.addf %39, %41 : vector<1x256xf32>
    %c0_30 = arith.constant 0 : index
    %c0_31 = arith.constant 0 : index
    %43 = vector.load %arg9[%c0_30, %c0_31] : memref<1x256xf32, #tpu.memory_space<vmem>>, vector<1x256xf32>
    tpu.vector_store %arg9[%c0_30, %c0_31], %42 {strides = array<i32>} : memref<1x256xf32, #tpu.memory_space<vmem>>, vector<1x256xf32>,
    %c0_i32_32 = arith.constant 0 : i32
    %44 = arith.cmpi eq, %arg1, %c0_i32_32 : i32
    %45 = arith.extui %44 : i1 to i32
    %c0_i32_33 = arith.constant 0 : i32
    %46 = arith.cmpi ne, %45, %c0_i32_33 : i32
    scf.if %46 {
      %c0_34 = arith.constant 0 : index
      %c0_35 = arith.constant 0 : index
      %47 = vector.load %arg7[%c0_34, %c0_35] : memref<32x256xf32, #tpu.memory_space<vmem>>, vector<32x256xf32>
      %c0_36 = arith.constant 0 : index
      %c0_37 = arith.constant 0 : index
      %48 = vector.load %arg8[%c0_36, %c0_37] : memref<32x256xf32, #tpu.memory_space<vmem>>, vector<32x256xf32>
      %49 = tpu.iota {dimensions = array<i32: 0>} : vector<32x256xi32>
      %c10_i32 = arith.constant 10 : i32
      %50 = vector.broadcast %c10_i32 : i32 to vector<32x256xi32>
      %51 = arith.cmpi slt, %49, %50 : vector<32x256xi32>
      %52 = arith.extui %51 : vector<32x256xi1> to vector<32x256xi32>
      %53 = arith.sitofp %52 : vector<32x256xi32> to vector<32x256xf32>
      %c10_i32_38 = arith.constant 10 : i32
      %54 = vector.broadcast %c10_i32_38 : i32 to vector<32x256xi32>
      %55 = arith.cmpi sge, %49, %54 : vector<32x256xi32>
      %c30_i32 = arith.constant 30 : i32
      %56 = vector.broadcast %c30_i32 : i32 to vector<32x256xi32>
      %57 = arith.cmpi slt, %49, %56 : vector<32x256xi32>
      %58 = arith.andi %55, %57 : vector<32x256xi1>
      %59 = arith.extui %58 : vector<32x256xi1> to vector<32x256xi32>
      %60 = arith.sitofp %59 : vector<32x256xi32> to vector<32x256xf32>
      %61 = arith.mulf %47, %53 : vector<32x256xf32>
      %62 = vector.shape_cast %61 : vector<32x256xf32> to vector<1x32x256xf32>
      %cst_39 = arith.constant dense<0.000000e+00> : vector<1xf32>
      %63 = vector.multi_reduction <add>, %62, %cst_39 [1, 2] : vector<1x32x256xf32> to vector<1xf32>
      %64 = vector.shape_cast %63 : vector<1xf32> to vector<1x1x1xf32>
      %65 = vector.extract %64[0, 0, 0] : f32 from vector<1x1x1xf32>
      %66 = arith.mulf %48, %53 : vector<32x256xf32>
      %67 = vector.shape_cast %66 : vector<32x256xf32> to vector<1x32x256xf32>
      %cst_40 = arith.constant dense<0.000000e+00> : vector<1xf32>
      %68 = vector.multi_reduction <add>, %67, %cst_40 [1, 2] : vector<1x32x256xf32> to vector<1xf32>
      %69 = vector.shape_cast %68 : vector<1xf32> to vector<1x1x1xf32>
      %70 = vector.extract %69[0, 0, 0] : f32 from vector<1x1x1xf32>
      %71 = arith.mulf %47, %60 : vector<32x256xf32>
      %72 = vector.shape_cast %71 : vector<32x256xf32> to vector<1x32x256xf32>
      %cst_41 = arith.constant dense<0.000000e+00> : vector<1xf32>
      %73 = vector.multi_reduction <add>, %72, %cst_41 [1, 2] : vector<1x32x256xf32> to vector<1xf32>
      %74 = vector.shape_cast %73 : vector<1xf32> to vector<1x1x1xf32>
      %75 = vector.extract %74[0, 0, 0] : f32 from vector<1x1x1xf32>
      %76 = arith.mulf %48, %60 : vector<32x256xf32>
      %77 = vector.shape_cast %76 : vector<32x256xf32> to vector<1x32x256xf32>
      %cst_42 = arith.constant dense<0.000000e+00> : vector<1xf32>
      %78 = vector.multi_reduction <add>, %77, %cst_42 [1, 2] : vector<1x32x256xf32> to vector<1xf32>
      %79 = vector.shape_cast %78 : vector<1xf32> to vector<1x1x1xf32>
      %80 = vector.extract %79[0, 0, 0] : f32 from vector<1x1x1xf32>
      %c0_43 = arith.constant 0 : index
      %c0_44 = arith.constant 0 : index
      %81 = vector.load %arg10[%c0_43, %c0_44] : memref<1x256xf32, #tpu.memory_space<vmem>>, vector<1x256xf32>
      %82 = vector.shape_cast %81 : vector<1x256xf32> to vector<1x1x256xf32>
      %cst_45 = arith.constant dense<0.000000e+00> : vector<1xf32>
      %83 = vector.multi_reduction <add>, %82, %cst_45 [1, 2] : vector<1x1x256xf32> to vector<1xf32>
      %84 = vector.shape_cast %83 : vector<1xf32> to vector<1x1x1xf32>
      %85 = vector.extract %84[0, 0, 0] : f32 from vector<1x1x1xf32>
      %c0_46 = arith.constant 0 : index
      %c0_47 = arith.constant 0 : index
      %86 = vector.load %arg9[%c0_46, %c0_47] : memref<1x256xf32, #tpu.memory_space<vmem>>, vector<1x256xf32>
      %87 = vector.shape_cast %86 : vector<1x256xf32> to vector<1x1x256xf32>
      %cst_48 = arith.constant dense<0.000000e+00> : vector<1xf32>
      %88 = vector.multi_reduction <add>, %87, %cst_48 [1, 2] : vector<1x1x256xf32> to vector<1xf32>
      %89 = vector.shape_cast %88 : vector<1xf32> to vector<1x1x1xf32>
      %90 = vector.extract %89[0, 0, 0] : f32 from vector<1x1x1xf32>
      %91 = tpu.iota {dimensions = array<i32: 1>} : vector<1x8xi32>
      %c0_i32_49 = arith.constant 0 : i32
      %92 = vector.broadcast %c0_i32_49 : i32 to vector<1x8xi32>
      %93 = arith.cmpi eq, %91, %92 : vector<1x8xi32>
      %cst_50 = arith.constant 0.000000e+00 : f32
      %94 = vector.broadcast %65 : f32 to vector<1x8xf32>
      %95 = vector.broadcast %cst_50 : f32 to vector<1x8xf32>
      %96 = arith.select %93, %94, %95 : vector<1x8xi1>, vector<1x8xf32>
      %c1_i32 = arith.constant 1 : i32
      %97 = vector.broadcast %c1_i32 : i32 to vector<1x8xi32>
      %98 = arith.cmpi eq, %91, %97 : vector<1x8xi32>
      %cst_51 = arith.constant 0.000000e+00 : f32
      %99 = vector.broadcast %70 : f32 to vector<1x8xf32>
      %100 = vector.broadcast %cst_51 : f32 to vector<1x8xf32>
      %101 = arith.select %98, %99, %100 : vector<1x8xi1>, vector<1x8xf32>
      %102 = arith.addf %96, %101 : vector<1x8xf32>
      %c2_i32 = arith.constant 2 : i32
      %103 = vector.broadcast %c2_i32 : i32 to vector<1x8xi32>
      %104 = arith.cmpi eq, %91, %103 : vector<1x8xi32>
      %cst_52 = arith.constant 0.000000e+00 : f32
      %105 = vector.broadcast %75 : f32 to vector<1x8xf32>
      %106 = vector.broadcast %cst_52 : f32 to vector<1x8xf32>
      %107 = arith.select %104, %105, %106 : vector<1x8xi1>, vector<1x8xf32>
      %108 = arith.addf %102, %107 : vector<1x8xf32>
      %c3_i32 = arith.constant 3 : i32
      %109 = vector.broadcast %c3_i32 : i32 to vector<1x8xi32>
      %110 = arith.cmpi eq, %91, %109 : vector<1x8xi32>
      %cst_53 = arith.constant 0.000000e+00 : f32
      %111 = vector.broadcast %80 : f32 to vector<1x8xf32>
      %112 = vector.broadcast %cst_53 : f32 to vector<1x8xf32>
      %113 = arith.select %110, %111, %112 : vector<1x8xi1>, vector<1x8xf32>
      %114 = arith.addf %108, %113 : vector<1x8xf32>
      %c4_i32 = arith.constant 4 : i32
      %115 = vector.broadcast %c4_i32 : i32 to vector<1x8xi32>
      %116 = arith.cmpi eq, %91, %115 : vector<1x8xi32>
      %cst_54 = arith.constant 0.000000e+00 : f32
      %117 = vector.broadcast %85 : f32 to vector<1x8xf32>
      %118 = vector.broadcast %cst_54 : f32 to vector<1x8xf32>
      %119 = arith.select %116, %117, %118 : vector<1x8xi1>, vector<1x8xf32>
      %120 = arith.addf %114, %119 : vector<1x8xf32>
      %c5_i32 = arith.constant 5 : i32
      %121 = vector.broadcast %c5_i32 : i32 to vector<1x8xi32>
      %122 = arith.cmpi eq, %91, %121 : vector<1x8xi32>
      %cst_55 = arith.constant 0.000000e+00 : f32
      %123 = vector.broadcast %90 : f32 to vector<1x8xf32>
      %124 = vector.broadcast %cst_55 : f32 to vector<1x8xf32>
      %125 = arith.select %122, %123, %124 : vector<1x8xi1>, vector<1x8xf32>
      %126 = arith.addf %120, %125 : vector<1x8xf32>
      %c0_56 = arith.constant 0 : index
      %c0_57 = arith.constant 0 : index
      %c0_58 = arith.constant 0 : index
      %127 = vector.load %arg6[%c0_56, %c0_57, %c0_58] : memref<1x1x8xf32, #tpu.memory_space<vmem>>, vector<1x1x8xf32>
      %128 = vector.shape_cast %127 : vector<1x1x8xf32> to vector<1x8xf32>
      %129 = vector.shape_cast %126 : vector<1x8xf32> to vector<1x1x8xf32>
      tpu.vector_store %arg6[%c0_56, %c0_57, %c0_58], %129 {strides = array<i32>} : memref<1x1x8xf32, #tpu.memory_space<vmem>>, vector<1x1x8xf32>,
    } else {
    }
    return
  }
  func.func @transform_0(%arg0: i32, %arg1: i32) -> (i32, i32, i32) {
    %c0_i32 = arith.constant 0 : i32
    %c0_i32_0 = arith.constant 0 : i32
    return %arg0, %c0_i32, %arg1 : i32, i32, i32
  }
  func.func @transform_1(%arg0: i32, %arg1: i32) -> (i32, i32, i32) {
    %c0_i32 = arith.constant 0 : i32
    %c0_i32_0 = arith.constant 0 : i32
    return %arg0, %c0_i32, %arg1 : i32, i32, i32
  }
  func.func @transform_2(%arg0: i32, %arg1: i32) -> (i32, i32, i32) {
    %c0_i32 = arith.constant 0 : i32
    %c0_i32_0 = arith.constant 0 : i32
    return %arg0, %c0_i32, %arg1 : i32, i32, i32
  }
  func.func @transform_3(%arg0: i32, %arg1: i32) -> (i32, i32, i32) {
    %c0_i32 = arith.constant 0 : i32
    %c0_i32_0 = arith.constant 0 : i32
    return %arg0, %c0_i32, %arg1 : i32, i32, i32
  }
  func.func @transform_4(%arg0: i32, %arg1: i32) -> (i32, i32, i32) {
    %c0_i32 = arith.constant 0 : i32
    %c0_i32_0 = arith.constant 0 : i32
    %c0_i32_1 = arith.constant 0 : i32
    return %arg0, %c0_i32, %c0_i32_0 : i32, i32, i32
  }
}

</mosaic_0001>

<llo_original>
// kernel: three_part_loss_forward.1
$region0: #{three_part_loss_forward.1}
  #allocation0 [shape = 'u32[]', space=smem, size = 0x4, offset = 0x4, fixed_abs, tag = 'smem constant byte address 0x4 - core index']
  #allocation1 [shape = 'u32[144,128]{1,0:T(1,128)}', space=vmem, size = 0x12000, scoped, tag = 'internal scratch']
  #allocation2 [shape = 'f32[32,256]{1,0:T(8,128)}', space=vmem, size = 0x8000, scoped, tag = 'scratch operand']
  #allocation3 [shape = 'f32[32,256]{1,0:T(8,128)}', space=vmem, size = 0x8000, scoped, tag = 'scratch operand']
  #allocation4 [shape = 'f32[1,256]{1,0:T(1,128)}', space=vmem, size = 0x400, scoped, tag = 'scratch operand']
  #allocation5 [shape = 'f32[1,256]{1,0:T(1,128)}', space=vmem, size = 0x400, scoped, tag = 'scratch operand']
  %s0 = inlined_call_operand.vmem [shape: f32[2,32,256], index: 0, kind: input, shape index: {}]
  %s1 = inlined_call_operand.vmem [shape: f32[2,32,256], index: 1, kind: input, shape index: {}]
  %s2 = inlined_call_operand.vmem [shape: f32[2,32,256], index: 2, kind: input, shape index: {}]
  %s3 = inlined_call_operand.vmem [shape: f32[2,1,256], index: 3, kind: input, shape index: {}]
  %s4 = inlined_call_operand.vmem [shape: f32[2,1,8], index: 4, kind: output, shape index: {}]
  %s5 = sld [smem:[#allocation0]]
  $region57: #{three_part_loss_forward.1} parent=0
    _
  %s7 = ssub.s32 1, %s5
  %s8 = scalar_select 0, %s7, %s5
  loop: start=0, step=1, limit=4
  $region2: #{three_part_loss_forward.1} parent=0 // loop_pre_header
    _
  $region3: #{three_part_loss_forward.1} parent=0 // loop_header
    %s10 = sphi 0, %s14
    %p11 = scmp.ge.s32.totalorder %s10, 4
    %s17 = sphi 0, %s29
    %s18 = sphi 0, %s25
    %s19 = sphi 0, %s17
    %s20 = sphi 0, %s18
    %s21 = sphi 0, %s19
    %s22 = sphi 0, %s20
    %s34 = sphi 0, %s36
    %s37 = sphi 0, %s34
    %s38 = sphi 0, %s37
    %s54 = sphi 0, %s38
    %s62 = sphi 0, %s64
    %s65 = sphi 0, %s62
    %s66 = sphi 0, %s65
    %s82 = sphi 0, %s66
    %s90 = sphi 0, %s92
    %s93 = sphi 0, %s90
    %s94 = sphi 0, %s93
    %s110 = sphi 0, %s94
    %s118 = sphi 0, %s120
    %s121 = sphi 0, %s118
    %s122 = sphi 0, %s121
    %s138 = sphi 0, %s122
    %s144 = sphi 0, %s146
    %s147 = sphi 0, %s144
    %s148 = sphi 0, %s147
    %s164 = sphi 0, %s148
  $region4: #{three_part_loss_forward.1} parent=0 // loop_header_branch
    %13 = sbr.rel (%p11) target = $region8
  $region5: #{three_part_loss_forward.1} parent=0 // loop_body
    %s15 = ssub.s32 %s10, 1
    %s16 = ssub.s32 %s10, 2
    %s23 = sadd.s32 1, %s18
    %p24 = scmp.ge.s32.totalorder %s23, 1
    %s25 = scalar_select %p24, 0, %s23
    %s26 = sadd.s32 1, %s17
    %s27 = scalar_select %p24, %s26, %s17
    %p28 = scmp.ge.s32.totalorder %s27, 2
    %s29 = scalar_select %p28, 0, %s27
    %s30 = ssub.s32 %s17, %s29
    %s31 = ssub.s32 %s18, %s25
    %s32 = sor.u32 %s30, %s31
    %p33 = scmp.eq.s32.totalorder %s32, 0
    %s35 = sadd.s32 %s34, 1
    %s36 = scalar_select %p33, %s34, %s35
    %p39 = pneg %p33
    %p40 = scmp.eq.s32.totalorder %s10, 1
    %p41 = por %p39, %p40
    %p42 = scmp.ne.s32.totalorder %s34, %s37
    %p43 = scmp.eq.s32.totalorder %s10, 0
    %p44 = por %p42, %p43
    %p45 = scmp.ne.s32.totalorder %s34, %s37
    %p46 = scmp.eq.s32.totalorder %s15, 1
    %p47 = por %p45, %p46
    %p48 = scmp.ne.s32.totalorder %s37, %s38
    %p49 = scmp.eq.s32.totalorder %s15, 0
    %p50 = por %p48, %p49
    %p51 = scmp.ne.s32.totalorder %s37, %s38
    %p52 = scmp.eq.s32.totalorder %s16, 1
    %p53 = por %p51, %p52
    %p55 = scmp.ne.s32.totalorder %s38, %s54
    %p56 = scmp.eq.s32.totalorder %s16, 0
    %p57 = por %p55, %p56
    %s58 = ssub.s32 %s17, %s29
    %s59 = ssub.s32 %s18, %s25
    %s60 = sor.u32 %s58, %s59
    %p61 = scmp.eq.s32.totalorder %s60, 0
    %s63 = sadd.s32 %s62, 1
    %s64 = scalar_select %p61, %s62, %s63
    %p67 = pneg %p61
    %p68 = scmp.eq.s32.totalorder %s10, 1
    %p69 = por %p67, %p68
    %p70 = scmp.ne.s32.totalorder %s62, %s65
    %p71 = scmp.eq.s32.totalorder %s10, 0
    %p72 = por %p70, %p71
    %p73 = scmp.ne.s32.totalorder %s62, %s65
    %p74 = scmp.eq.s32.totalorder %s15, 1
    %p75 = por %p73, %p74
    %p76 = scmp.ne.s32.totalorder %s65, %s66
    %p77 = scmp.eq.s32.totalorder %s15, 0
    %p78 = por %p76, %p77
    %p79 = scmp.ne.s32.totalorder %s65, %s66
    %p80 = scmp.eq.s32.totalorder %s16, 1
    %p81 = por %p79, %p80
    %p83 = scmp.ne.s32.totalorder %s66, %s82
    %p84 = scmp.eq.s32.totalorder %s16, 0
    %p85 = por %p83, %p84
    %s86 = ssub.s32 %s17, %s29
    %s87 = ssub.s32 %s18, %s25
    %s88 = sor.u32 %s86, %s87
    %p89 = scmp.eq.s32.totalorder %s88, 0
    %s91 = sadd.s32 %s90, 1
    %s92 = scalar_select %p89, %s90, %s91
    %p95 = pneg %p89
    %p96 = scmp.eq.s32.totalorder %s10, 1
    %p97 = por %p95, %p96
    %p98 = scmp.ne.s32.totalorder %s90, %s93
    %p99 = scmp.eq.s32.totalorder %s10, 0
    %p100 = por %p98, %p99
    %p101 = scmp.ne.s32.totalorder %s90, %s93
    %p102 = scmp.eq.s32.totalorder %s15, 1
    %p103 = por %p101, %p102
    %p104 = scmp.ne.s32.totalorder %s93, %s94
    %p105 = scmp.eq.s32.totalorder %s15, 0
    %p106 = por %p104, %p105
    %p107 = scmp.ne.s32.totalorder %s93, %s94
    %p108 = scmp.eq.s32.totalorder %s16, 1
    %p109 = por %p107, %p108
    %p111 = scmp.ne.s32.totalorder %s94, %s110
    %p112 = scmp.eq.s32.totalorder %s16, 0
    %p113 = por %p111, %p112
    %s114 = ssub.s32 %s17, %s29
    %s115 = ssub.s32 %s18, %s25
    %s116 = sor.u32 %s114, %s115
    %p117 = scmp.eq.s32.totalorder %s116, 0
    %s119 = sadd.s32 %s118, 1
    %s120 = scalar_select %p117, %s118, %s119
    %p123 = pneg %p117
    %p124 = scmp.eq.s32.totalorder %s10, 1
    %p125 = por %p123, %p124
    %p126 = scmp.ne.s32.totalorder %s118, %s121
    %p127 = scmp.eq.s32.totalorder %s10, 0
    %p128 = por %p126, %p127
    %p129 = scmp.ne.s32.totalorder %s118, %s121
    %p130 = scmp.eq.s32.totalorder %s15, 1
    %p131 = por %p129, %p130
    %p132 = scmp.ne.s32.totalorder %s121, %s122
    %p133 = scmp.eq.s32.totalorder %s15, 0
    %p134 = por %p132, %p133
    %p135 = scmp.ne.s32.totalorder %s121, %s122
    %p136 = scmp.eq.s32.totalorder %s16, 1
    %p137 = por %p135, %p136
    %p139 = scmp.ne.s32.totalorder %s122, %s138
    %p140 = scmp.eq.s32.totalorder %s16, 0
    %p141 = por %p139, %p140
    %s142 = ssub.s32 %s17, %s29
    %p143 = scmp.eq.s32.totalorder %s142, 0
    %s145 = sadd.s32 %s144, 1
    %s146 = scalar_select %p143, %s144, %s145
    %p149 = pneg %p143
    %p150 = scmp.eq.s32.totalorder %s10, 1
    %p151 = por %p149, %p150
    %p152 = scmp.ne.s32.totalorder %s144, %s147
    %p153 = scmp.eq.s32.totalorder %s10, 0
    %p154 = por %p152, %p153
    %p155 = scmp.ne.s32.totalorder %s144, %s147
    %p156 = scmp.eq.s32.totalorder %s15, 1
    %p157 = por %p155, %p156
    %p158 = scmp.ne.s32.totalorder %s147, %s148
    %p159 = scmp.eq.s32.totalorder %s15, 0
    %p160 = por %p158, %p159
    %p161 = scmp.ne.s32.totalorder %s147, %s148
    %p162 = scmp.eq.s32.totalorder %s16, 1
    %p163 = por %p161, %p162
    %p165 = scmp.ne.s32.totalorder %s148, %s164
    %p166 = scmp.eq.s32.totalorder %s16, 0
    %p167 = por %p165, %p166
    %p168 = scmp.le.s32.totalorder 1, %s10
    %p169 = scmp.lt.s32.totalorder %s10, 3
    %p170 = pnand %p168, %p169
    %p171 = pneg %p170
    // Predicated region
    $region9: #{three_part_loss_forward.1} parent=5 // pred_check
      _
    $region10: #{three_part_loss_forward.1} parent=5 // pred_check_branch
      %173 = sbr.rel (%p170) target = $region12
    $region11: #{three_part_loss_forward.1} parent=5 // pred_region
      %s174 = ssub.s32 %s10, 1
    $region12: #{three_part_loss_forward.1} parent=5 // pred_fallthru
      _
    %p175 = scmp.lt.s32.totalorder %s10, 2
    // Predicated region
    $region13: #{three_part_loss_forward.1} parent=5 // pred_check
      %p176 = pneg %p175
    $region14: #{three_part_loss_forward.1} parent=5 // pred_check_branch
      %178 = sbr.rel (%p176) target = $region16
    $region15: #{three_part_loss_forward.1} parent=5 // pred_region
      // Predicated region
      $region17: #{three_part_loss_forward.1} parent=15 // pred_check
        %p179 = pneg %p44
      $region18: #{three_part_loss_forward.1} parent=15 // pred_check_branch
        %181 = sbr.rel (%p179) target = $region20
      $region19: #{three_part_loss_forward.1} parent=15 // pred_region
        %s182 = smul.u32 2, %s18
        %p183 = scmp.lt.s32.totalorder %s17, 1
        %s184 = scalar_select %p183, %s17, 1
        %p185 = scmp.lt.s32.totalorder %s182, 1
        %s186 = scalar_select %p185, %s182, 1
        %s187 = smul.addr %s184, 8
        %s188 = sadd.s32 %s186, %s187
        %s189 = smul.addr %s188, 8
        %s190 = scalar_lea.vmem %s0, %s189
        %s191 = smul.u32 2, %s18
      $region20: #{three_part_loss_forward.1} parent=15 // pred_fallthru
        _
      // Predicated region
      $region21: #{three_part_loss_forward.1} parent=15 // pred_check
        %p192 = pneg %p72
      $region22: #{three_part_loss_forward.1} parent=15 // pred_check_branch
        %194 = sbr.rel (%p192) target = $region24
      $region23: #{three_part_loss_forward.1} parent=15 // pred_region
        %s195 = smul.u32 2, %s18
        %p196 = scmp.lt.s32.totalorder %s17, 1
        %s197 = scalar_select %p196, %s17, 1
        %p198 = scmp.lt.s32.totalorder %s195, 1
        %s199 = scalar_select %p198, %s195, 1
        %s200 = smul.addr %s197, 8
        %s201 = sadd.s32 %s199, %s200
        %s202 = smul.addr %s201, 8
        %s203 = scalar_lea.vmem %s1, %s202
        %s204 = smul.u32 2, %s18
      $region24: #{three_part_loss_forward.1} parent=15 // pred_fallthru
        _
      // Predicated region
      $region25: #{three_part_loss_forward.1} parent=15 // pred_check
        %p205 = pneg %p100
      $region26: #{three_part_loss_forward.1} parent=15 // pred_check_branch
        %207 = sbr.rel (%p205) target = $region28
      $region27: #{three_part_loss_forward.1} parent=15 // pred_region
        %s208 = smul.u32 2, %s18
        %p209 = scmp.lt.s32.totalorder %s17, 1
        %s210 = scalar_select %p209, %s17, 1
        %p211 = scmp.lt.s32.totalorder %s208, 1
        %s212 = scalar_select %p211, %s208, 1
        %s213 = smul.addr %s210, 8
        %s214 = sadd.s32 %s212, %s213
        %s215 = smul.addr %s214, 8
        %s216 = scalar_lea.vmem %s2, %s215
        %s217 = smul.u32 2, %s18
      $region28: #{three_part_loss_forward.1} parent=15 // pred_fallthru
        _
      // Predicated region
      $region29: #{three_part_loss_forward.1} parent=15 // pred_check
        %p218 = pneg %p128
      $region30: #{three_part_loss_forward.1} parent=15 // pred_check_branch
        %220 = sbr.rel (%p218) target = $region32
      $region31: #{three_part_loss_forward.1} parent=15 // pred_region
        %s221 = smul.u32 2, %s18
        %p222 = scmp.lt.s32.totalorder %s17, 1
        %s223 = scalar_select %p222, %s17, 1
        %p224 = scmp.lt.s32.totalorder %s221, 1
        %s225 = scalar_select %p224, %s221, 1
        %s226 = smul.addr %s223, 2
        %s227 = sadd.s32 %s225, %s226
        %s228 = scalar_lea.vmem %s3, %s227
        %s229 = smul.u32 2, %s18
      $region32: #{three_part_loss_forward.1} parent=15 // pred_fallthru
        _
    $region16: #{three_part_loss_forward.1} parent=5 // pred_fallthru
      _
    %p230 = scmp.le.s32.totalorder 1, %s10
    %p231 = scmp.lt.s32.totalorder %s10, 3
    %p232 = pnand %p230, %p231
    %p233 = pneg %p232
    // Predicated region
    $region33: #{three_part_loss_forward.1} parent=5 // pred_check
      _
    $region34: #{three_part_loss_forward.1} parent=5 // pred_check_branch
      %235 = sbr.rel (%p232) target = $region36
    $region35: #{three_part_loss_forward.1} parent=5 // pred_region
      %s236 = ssub.s32 %s10, 1
      %s237 = smul.u32 2, %s20
      %p238 = scmp.lt.s32.totalorder %s19, 1
      %s239 = scalar_select %p238, %s19, 1
      %p240 = scmp.lt.s32.totalorder %s237, 1
      %s241 = scalar_select %p240, %s237, 1
      %s242 = smul.addr %s239, 8
      %s243 = sadd.s32 %s241, %s242
      %s244 = smul.addr %s243, 8
      %s245 = scalar_lea.vmem %s0, %s244
      %p246 = pneg %p50
      %p247 = pneg %p47
      %s248 = smul.u32 2, %s20
      %p249 = scmp.lt.s32.totalorder %s19, 1
      %s250 = scalar_select %p249, %s19, 1
      %p251 = scmp.lt.s32.totalorder %s248, 1
      %s252 = scalar_select %p251, %s248, 1
      %s253 = smul.addr %s250, 8
      %s254 = sadd.s32 %s252, %s253
      %s255 = smul.addr %s254, 8
      %s256 = scalar_lea.vmem %s1, %s255
      %p257 = pneg %p78
      %p258 = pneg %p75
      %s259 = smul.u32 2, %s20
      %p260 = scmp.lt.s32.totalorder %s19, 1
      %s261 = scalar_select %p260, %s19, 1
      %p262 = scmp.lt.s32.totalorder %s259, 1
      %s263 = scalar_select %p262, %s259, 1
      %s264 = smul.addr %s261, 8
      %s265 = sadd.s32 %s263, %s264
      %s266 = smul.addr %s265, 8
      %s267 = scalar_lea.vmem %s2, %s266
      %p268 = pneg %p106
      %p269 = pneg %p103
      %s270 = smul.u32 2, %s20
      %p271 = scmp.lt.s32.totalorder %s19, 1
      %s272 = scalar_select %p271, %s19, 1
      %p273 = scmp.lt.s32.totalorder %s270, 1
      %s274 = scalar_select %p273, %s270, 1
      %s275 = smul.addr %s272, 2
      %s276 = sadd.s32 %s274, %s275
      %s277 = scalar_lea.vmem %s3, %s276
      %p278 = pneg %p134
      %p279 = pneg %p131
      %p280 = pneg %p160
      %p281 = pneg %p157
      %p282 = scmp.lt.s32.totalorder %s19, 1
      %s283 = scalar_select %p282, %s19, 1
      %s284 = scalar_lea.vmem %s4, %s283
      %s285 = smul.u32 2, %s20
      %p286 = scmp.lt.s32.totalorder %s19, 1
      %s287 = scalar_select %p286, %s19, 1
      %p288 = scmp.lt.s32.totalorder %s285, 1
      %s289 = scalar_select %p288, %s285, 1
      %s290 = smul.addr %s287, 8
      %s291 = sadd.s32 %s289, %s290
      %s292 = smul.addr %s291, 8
      %s293 = scalar_lea.vmem %s0, %s292
      %s294 = smul.u32 2, %s20
      %s295 = smul.u32 2, %s20
      %p296 = scmp.lt.s32.totalorder %s19, 1
      %s297 = scalar_select %p296, %s19, 1
      %p298 = scmp.lt.s32.totalorder %s295, 1
      %s299 = scalar_select %p298, %s295, 1
      %s300 = smul.addr %s297, 8
      %s301 = sadd.s32 %s299, %s300
      %s302 = smul.addr %s301, 8
      %s303 = scalar_lea.vmem %s1, %s302
      %s304 = smul.u32 2, %s20
      %s305 = smul.u32 2, %s20
      %p306 = scmp.lt.s32.totalorder %s19, 1
      %s307 = scalar_select %p306, %s19, 1
      %p308 = scmp.lt.s32.totalorder %s305, 1
      %s309 = scalar_select %p308, %s305, 1
      %s310 = smul.addr %s307, 8
      %s311 = sadd.s32 %s309, %s310
      %s312 = smul.addr %s311, 8
      %s313 = scalar_lea.vmem %s2, %s312
      %s314 = smul.u32 2, %s20
      %s315 = smul.u32 2, %s20
      %p316 = scmp.lt.s32.totalorder %s19, 1
      %s317 = scalar_select %p316, %s19, 1
      %p318 = scmp.lt.s32.totalorder %s315, 1
      %s319 = scalar_select %p318, %s315, 1
      %s320 = smul.addr %s317, 2
      %s321 = sadd.s32 %s319, %s320
      %s322 = scalar_lea.vmem %s3, %s321
      %s323 = smul.u32 2, %s20
      %p324 = scmp.lt.s32.totalorder %s19, 1
      %s325 = scalar_select %p324, %s19, 1
      %s326 = scalar_lea.vmem %s4, %s325
      %p327 = scmp.eq.s32.totalorder %s20, 0
      // Predicated region
      $region37: #{three_part_loss_forward.1} parent=35 // pred_check
        %p328 = pneg %p327
      $region38: #{three_part_loss_forward.1} parent=35 // pred_check_branch
        %330 = sbr.rel (%p328) target = $region40
      $region39: #{three_part_loss_forward.1} parent=35 // pred_region
        %331 = vst [vmem:[#allocation2] sm:$0xff] 0.0
        %332 = vst [vmem:[#allocation2 + $0x8] sm:$0xff] 0.0
        %333 = vst [vmem:[#allocation2 + $0x10] sm:$0xff] 0.0
        %334 = vst [vmem:[#allocation2 + $0x18] sm:$0xff] 0.0
        %335 = vst [vmem:[#allocation2 + $0x20] sm:$0xff] 0.0
        %336 = vst [vmem:[#allocation2 + $0x28] sm:$0xff] 0.0
        %337 = vst [vmem:[#allocation2 + $0x30] sm:$0xff] 0.0
        %338 = vst [vmem:[#allocation2 + $0x38] sm:$0xff] 0.0
        %339 = vst [vmem:[#allocation3] sm:$0xff] 0.0
        %340 = vst [vmem:[#allocation3 + $0x8] sm:$0xff] 0.0
        %341 = vst [vmem:[#allocation3 + $0x10] sm:$0xff] 0.0
        %342 = vst [vmem:[#allocation3 + $0x18] sm:$0xff] 0.0
        %343 = vst [vmem:[#allocation3 + $0x20] sm:$0xff] 0.0
        %344 = vst [vmem:[#allocation3 + $0x28] sm:$0xff] 0.0
        %345 = vst [vmem:[#allocation3 + $0x30] sm:$0xff] 0.0
        %346 = vst [vmem:[#allocation3 + $0x38] sm:$0xff] 0.0
        %v347 = vlaneseq
        %vm348 = vcmp.ge.s32.totalorder %v347, 0
        %vm349 = vcmp.lt.s32.totalorder %v347, 256
        %vm350 = vmand %vm348, %vm349
        %351 = vst.msk [vmem:[#allocation4] sm:$0x3] %vm350, 0.0
        %352 = vst.msk [vmem:[#allocation5] sm:$0x3] %vm350, 0.0
      $region40: #{three_part_loss_forward.1} parent=35 // pred_fallthru
        _
      %v353 = vld [vmem:[%s293] sm:$0xff]
      %v354 = vld [vmem:[%s293 + $0x8] sm:$0xff]
      %v355 = vld [vmem:[%s293 + $0x10] sm:$0xff]
      %v356 = vld [vmem:[%s293 + $0x18] sm:$0xff]
      %v357 = vld [vmem:[%s293 + $0x20] sm:$0xff]
      %v358 = vld [vmem:[%s293 + $0x28] sm:$0xff]
      %v359 = vld [vmem:[%s293 + $0x30] sm:$0xff]
      %v360 = vld [vmem:[%s293 + $0x38] sm:$0xff]
      %v361 = vld [vmem:[%s303] sm:$0xff]
      %v362 = vld [vmem:[%s303 + $0x8] sm:$0xff]
      %v363 = vld [vmem:[%s303 + $0x10] sm:$0xff]
      %v364 = vld [vmem:[%s303 + $0x18] sm:$0xff]
      %v365 = vld [vmem:[%s303 + $0x20] sm:$0xff]
      %v366 = vld [vmem:[%s303 + $0x28] sm:$0xff]
      %v367 = vld [vmem:[%s303 + $0x30] sm:$0xff]
      %v368 = vld [vmem:[%s303 + $0x38] sm:$0xff]
      %v369 = vld [vmem:[%s313] sm:$0xff]
      %v370 = vld [vmem:[%s313 + $0x8] sm:$0xff]
      %v371 = vld [vmem:[%s313 + $0x10] sm:$0xff]
      %v372 = vld [vmem:[%s313 + $0x18] sm:$0xff]
      %v373 = vld [vmem:[%s313 + $0x20] sm:$0xff]
      %v374 = vld [vmem:[%s313 + $0x28] sm:$0xff]
      %v375 = vld [vmem:[%s313 + $0x30] sm:$0xff]
      %v376 = vld [vmem:[%s313 + $0x38] sm:$0xff]
      %v377 = vld [vmem:[%s322] sm:$0x3]
      %vm378 = vcmp.ge.f32.partialorder %v377, 0.1
      %v379 = vld [vmem:[#allocation2] sm:$0xff]
      %v380 = vld [vmem:[#allocation2 + $0x8] sm:$0xff]
      %v381 = vld [vmem:[#allocation2 + $0x10] sm:$0xff]
      %v382 = vld [vmem:[#allocation2 + $0x18] sm:$0xff]
      %v383 = vld [vmem:[#allocation2 + $0x20] sm:$0xff]
      %v384 = vld [vmem:[#allocation2 + $0x28] sm:$0xff]
      %v385 = vld [vmem:[#allocation2 + $0x30] sm:$0xff]
      %v386 = vld [vmem:[#allocation2 + $0x38] sm:$0xff]
      %v387 = vsel %vm378, 1, 0
      %v388 = vlaneseq
      %v389 = vshrl.u32 %v388, 7
      %v390 = vsub.s32 0, %v389
      %v391 = vrot.slane %v387, %v390
      %v392 = vlaneseq
      %v393 = vshrl.u32 %v392, 7
      %v394 = vsub.s32 1, %v393
      %v395 = vrot.slane %v387, %v394
      %vm396 = vcmp.eq.s32.totalorder %v391, 1
      %vm397 = vcmp.eq.s32.totalorder %v395, 1
      %v398 = vsel %vm396, %v353, 0.0
      %v399 = vsel %vm397, %v354, 0.0
      %v400 = vsel %vm396, %v355, 0.0
      %v401 = vsel %vm397, %v356, 0.0
      %v402 = vsel %vm396, %v357, 0.0
      %v403 = vsel %vm397, %v358, 0.0
      %v404 = vsel %vm396, %v359, 0.0
      %v405 = vsel %vm397, %v360, 0.0
      %v406 = vadd.f32 %v379, %v398
      %v407 = vadd.f32 %v380, %v399
      %v408 = vadd.f32 %v381, %v400
      %v409 = vadd.f32 %v382, %v401
      %v410 = vadd.f32 %v383, %v402
      %v411 = vadd.f32 %v384, %v403
      %v412 = vadd.f32 %v385, %v404
      %v413 = vadd.f32 %v386, %v405
      %414 = vst [vmem:[#allocation2] sm:$0xff] %v406
      %415 = vst [vmem:[#allocation2 + $0x8] sm:$0xff] %v407
      %416 = vst [vmem:[#allocation2 + $0x10] sm:$0xff] %v408
      %417 = vst [vmem:[#allocation2 + $0x18] sm:$0xff] %v409
      %418 = vst [vmem:[#allocation2 + $0x20] sm:$0xff] %v410
      %419 = vst [vmem:[#allocation2 + $0x28] sm:$0xff] %v411
      %420 = vst [vmem:[#allocation2 + $0x30] sm:$0xff] %v412
      %421 = vst [vmem:[#allocation2 + $0x38] sm:$0xff] %v413
      %v422 = vld [vmem:[#allocation3] sm:$0xff]
      %v423 = vld [vmem:[#allocation3 + $0x8] sm:$0xff]
      %v424 = vld [vmem:[#allocation3 + $0x10] sm:$0xff]
      %v425 = vld [vmem:[#allocation3 + $0x18] sm:$0xff]
      %v426 = vld [vmem:[#allocation3 + $0x20] sm:$0xff]
      %v427 = vld [vmem:[#allocation3 + $0x28] sm:$0xff]
      %v428 = vld [vmem:[#allocation3 + $0x30] sm:$0xff]
      %v429 = vld [vmem:[#allocation3 + $0x38] sm:$0xff]
      %v430 = vsel %vm396, %v369, 0.0
      %v431 = vsel %vm397, %v370, 0.0
      %v432 = vsel %vm396, %v371, 0.0
      %v433 = vsel %vm397, %v372, 0.0
      %v434 = vsel %vm396, %v373, 0.0
      %v435 = vsel %vm397, %v374, 0.0
      %v436 = vsel %vm396, %v375, 0.0
      %v437 = vsel %vm397, %v376, 0.0
      %v438 = vadd.f32 %v422, %v430
      %v439 = vadd.f32 %v423, %v431
      %v440 = vadd.f32 %v424, %v432
      %v441 = vadd.f32 %v425, %v433
      %v442 = vadd.f32 %v426, %v434
      %v443 = vadd.f32 %v427, %v435
      %v444 = vadd.f32 %v428, %v436
      %v445 = vadd.f32 %v429, %v437
      %446 = vst [vmem:[#allocation3] sm:$0xff] %v438
      %447 = vst [vmem:[#allocation3 + $0x8] sm:$0xff] %v439
      %448 = vst [vmem:[#allocation3 + $0x10] sm:$0xff] %v440
      %449 = vst [vmem:[#allocation3 + $0x18] sm:$0xff] %v441
      %450 = vst [vmem:[#allocation3 + $0x20] sm:$0xff] %v442
      %451 = vst [vmem:[#allocation3 + $0x28] sm:$0xff] %v443
      %452 = vst [vmem:[#allocation3 + $0x30] sm:$0xff] %v444
      %453 = vst [vmem:[#allocation3 + $0x38] sm:$0xff] %v445
      %v454 = vld [vmem:[#allocation5] sm:$0x3]
      %v455 = vcvt.s32.f32 %v387
      %v456 = vadd.f32 %v454, %v455
      %v457 = vlaneseq
      %vm458 = vcmp.ge.s32.totalorder %v457, 0
      %vm459 = vcmp.lt.s32.totalorder %v457, 256
      %vm460 = vmand %vm458, %vm459
      %461 = vst.msk [vmem:[#allocation5] sm:$0x3] %vm460, %v456
      %v462 = vsub.f32 1.0, %v377
      %v464 = vlaneseq
      %v465 = vshrl.u32 %v464, 7
      %v466 = vsub.s32 0, %v465
      %v467 = vrot.slane %v462, %v466
      %v468 = vlaneseq
      %v469 = vshrl.u32 %v468, 7
      %v470 = vsub.s32 1, %v469
      %v471 = vrot.slane %v462, %v470
      %v474 = vmul.f32 %v369, %v467
      %v475 = vmul.f32 %v370, %v471
      %v476 = vmul.f32 %v371, %v467
      %v477 = vmul.f32 %v372, %v471
      %v478 = vmul.f32 %v373, %v467
      %v479 = vmul.f32 %v374, %v471
      %v480 = vmul.f32 %v375, %v467
      %v481 = vmul.f32 %v376, %v471
      %v482 = vadd.f32 %v361, %v474
      %v483 = vadd.f32 %v362, %v475
      %v484 = vadd.f32 %v363, %v476
      %v485 = vadd.f32 %v364, %v477
      %v486 = vadd.f32 %v365, %v478
      %v487 = vadd.f32 %v366, %v479
      %v488 = vadd.f32 %v367, %v480
      %v489 = vadd.f32 %v368, %v481
      %v490 = vsub.f32 %v353, %v482
      %v491 = vsub.f32 %v354, %v483
      %v492 = vsub.f32 %v355, %v484
      %v493 = vsub.f32 %v356, %v485
      %v494 = vsub.f32 %v357, %v486
      %v495 = vsub.f32 %v358, %v487
      %v496 = vsub.f32 %v359, %v488
      %v497 = vsub.f32 %v360, %v489
      %v498 = vmul.f32 %v490, %v490
      %v499 = vmul.f32 %v491, %v491
      %v500 = vmul.f32 %v492, %v492
      %v501 = vmul.f32 %v493, %v493
      %v502 = vmul.f32 %v494, %v494
      %v503 = vmul.f32 %v495, %v495
      %v504 = vmul.f32 %v496, %v496
      %v505 = vmul.f32 %v497, %v497
      %v506 = vld [vmem:[#allocation4] sm:$0x3]
      %v507 = vadd.f32 %v498, %v500
      %v508 = vadd.f32 %v507, %v502
      %v509 = vadd.f32 %v508, %v504
      %v510 = vrot.slane %v509, 4
      %v511 = vadd.f32 %v509, %v510
      %v512 = vrot.slane %v511, 2
      %v513 = vadd.f32 %v511, %v512
      %v514 = vrot.slane %v513, 1
      %v515 = vadd.f32 %v513, %v514
      %v516 = vadd.f32 %v499, %v501
      %v517 = vadd.f32 %v516, %v503
      %v518 = vadd.f32 %v517, %v505
      %v519 = vrot.slane %v518, 4
      %v520 = vadd.f32 %v518, %v519
      %v521 = vrot.slane %v520, 2
      %v522 = vadd.f32 %v520, %v521
      %v523 = vrot.slane %v522, 1
      %v524 = vadd.f32 %v522, %v523
      %v527 = vcombine.low %v515, %v524
      %v529 = vunpack.c.l.s4 1966171168
      %v530 = vunpack.c.0.s8 %v529
      %v531 = vlaneseq
      %v532 = vshrl.u32 %v531, 7
      %v533 = vsub.s32 %v530, %v532
      %v534 = vrot.slane %v527, %v533
      %v536 = vunpack.c.l.s4 1966171168
      %v537 = vunpack.c.0.s8 %v536
      %v538 = vlaneseq
      %v539 = vshrl.u32 %v538, 7
      %v540 = vsub.s32 %v537, %v539
      %v541 = vrot.slane %v534, %v540
      %v543 = vadd.f32 %v506, %v541
      %544 = vst.msk [vmem:[#allocation4] sm:$0x3] %vm460, %v543
      // Predicated region
      $region41: #{three_part_loss_forward.1} parent=35 // pred_check
        %p545 = pneg %p327
      $region42: #{three_part_loss_forward.1} parent=35 // pred_check_branch
        %547 = sbr.rel (%p545) target = $region44
      $region43: #{three_part_loss_forward.1} parent=35 // pred_region
        %v548 = vld [vmem:[#allocation2] sm:$0xff]
        %v549 = vld [vmem:[#allocation2 + $0x8] sm:$0xff]
        %v550 = vld [vmem:[#allocation2 + $0x10] sm:$0xff]
        %v551 = vld [vmem:[#allocation2 + $0x18] sm:$0xff]
        %v552 = vld [vmem:[#allocation2 + $0x20] sm:$0xff]
        %v553 = vld [vmem:[#allocation2 + $0x28] sm:$0xff]
        %v554 = vld [vmem:[#allocation2 + $0x30] sm:$0xff]
        %v555 = vld [vmem:[#allocation2 + $0x38] sm:$0xff]
        %v556 = vld [vmem:[#allocation3] sm:$0xff]
        %v557 = vld [vmem:[#allocation3 + $0x8] sm:$0xff]
        %v558 = vld [vmem:[#allocation3 + $0x10] sm:$0xff]
        %v559 = vld [vmem:[#allocation3 + $0x18] sm:$0xff]
        %v560 = vld [vmem:[#allocation3 + $0x20] sm:$0xff]
        %v561 = vld [vmem:[#allocation3 + $0x28] sm:$0xff]
        %v562 = vld [vmem:[#allocation3 + $0x30] sm:$0xff]
        %v563 = vld [vmem:[#allocation3 + $0x38] sm:$0xff]
        %v564 = vlaneseq
        %v565 = vshrl.u32 %v564, 7
        %v566 = vadd.s32 %v565, 8
        %v567 = vadd.s32 %v565, 16
        %v568 = vadd.s32 %v565, 24
        %vm569 = vcmp.lt.s32.totalorder %v565, 10
        %vm570 = vcmp.lt.s32.totalorder %v566, 10
        %vm571 = vcmp.lt.s32.totalorder %v567, 10
        %vm572 = vcmp.lt.s32.totalorder %v568, 10
        %v573 = vsel %vm569, 1, 0
        %v574 = vsel %vm570, 1, 0
        %v575 = vsel %vm571, 1, 0
        %v576 = vsel %vm572, 1, 0
        %v577 = vcvt.s32.f32 %v573
        %v578 = vcvt.s32.f32 %v574
        %v579 = vcvt.s32.f32 %v575
        %v580 = vcvt.s32.f32 %v576
        %vm581 = vcmp.ge.s32.totalorder %v565, 10
        %vm582 = vcmp.ge.s32.totalorder %v566, 10
        %vm583 = vcmp.ge.s32.totalorder %v567, 10
        %vm584 = vcmp.ge.s32.totalorder %v568, 10
        %vm585 = vcmp.lt.s32.totalorder %v565, 30
        %vm586 = vcmp.lt.s32.totalorder %v566, 30
        %vm587 = vcmp.lt.s32.totalorder %v567, 30
        %vm588 = vcmp.lt.s32.totalorder %v568, 30
        %vm589 = vmand %vm581, %vm585
        %vm590 = vmand %vm582, %vm586
        %vm591 = vmand %vm583, %vm587
        %vm592 = vmand %vm584, %vm588
        %v593 = vsel %vm589, 1, 0
        %v594 = vsel %vm590, 1, 0
        %v595 = vsel %vm591, 1, 0
        %v596 = vsel %vm592, 1, 0
        %v597 = vcvt.s32.f32 %v593
        %v598 = vcvt.s32.f32 %v594
        %v599 = vcvt.s32.f32 %v595
        %v600 = vcvt.s32.f32 %v596
        %v601 = vmul.f32 %v548, %v577
        %v602 = vmul.f32 %v549, %v577
        %v603 = vmul.f32 %v550, %v578
        %v604 = vmul.f32 %v551, %v578
        %v605 = vmul.f32 %v552, %v579
        %v606 = vmul.f32 %v553, %v579
        %v607 = vmul.f32 %v554, %v580
        %v608 = vmul.f32 %v555, %v580
        %v609 = vadd.f32 %v601, %v602
        %v610 = vadd.f32 %v609, %v603
        %v611 = vadd.f32 %v610, %v604
        %v612 = vadd.f32 %v611, %v605
        %v613 = vadd.f32 %v612, %v606
        %v614 = vadd.f32 %v613, %v607
        %v615 = vadd.f32 %v614, %v608
        %616 = vadd.xlane.f32.xlu0 %v615
        %v617 = vpop.xlane.xlu0 %616
        %v618 = vrot.slane %v617, 4
        %v619 = vadd.f32 %v617, %v618
        %v620 = vrot.slane %v619, 2
        %v621 = vadd.f32 %v619, %v620
        %v622 = vrot.slane %v621, 1
        %v623 = vadd.f32 %v621, %v622
        %s624 = vtos %v623
        %v625 = vmul.f32 %v556, %v577
        %v626 = vmul.f32 %v557, %v577
        %v627 = vmul.f32 %v558, %v578
        %v628 = vmul.f32 %v559, %v578
        %v629 = vmul.f32 %v560, %v579
        %v630 = vmul.f32 %v561, %v579
        %v631 = vmul.f32 %v562, %v580
        %v632 = vmul.f32 %v563, %v580
        %v633 = vadd.f32 %v625, %v626
        %v634 = vadd.f32 %v633, %v627
        %v635 = vadd.f32 %v634, %v628
        %v636 = vadd.f32 %v635, %v629
        %v637 = vadd.f32 %v636, %v630
        %v638 = vadd.f32 %v637, %v631
        %v639 = vadd.f32 %v638, %v632
        %640 = vadd.xlane.f32.xlu0 %v639
        %v641 = vpop.xlane.xlu0 %640
        %v642 = vrot.slane %v641, 4
        %v643 = vadd.f32 %v641, %v642
        %v644 = vrot.slane %v643, 2
        %v645 = vadd.f32 %v643, %v644
        %v646 = vrot.slane %v645, 1
        %v647 = vadd.f32 %v645, %v646
        %s648 = vtos %v647
        %v649 = vmul.f32 %v548, %v597
        %v650 = vmul.f32 %v549, %v597
        %v651 = vmul.f32 %v550, %v598
        %v652 = vmul.f32 %v551, %v598
        %v653 = vmul.f32 %v552, %v599
        %v654 = vmul.f32 %v553, %v599
        %v655 = vmul.f32 %v554, %v600
        %v656 = vmul.f32 %v555, %v600
        %v657 = vadd.f32 %v649, %v650
        %v658 = vadd.f32 %v657, %v651
        %v659 = vadd.f32 %v658, %v652
        %v660 = vadd.f32 %v659, %v653
        %v661 = vadd.f32 %v660, %v654
        %v662 = vadd.f32 %v661, %v655
        %v663 = vadd.f32 %v662, %v656
        %664 = vadd.xlane.f32.xlu0 %v663
        %v665 = vpop.xlane.xlu0 %664
        %v666 = vrot.slane %v665, 4
        %v667 = vadd.f32 %v665, %v666
        %v668 = vrot.slane %v667, 2
        %v669 = vadd.f32 %v667, %v668
        %v670 = vrot.slane %v669, 1
        %v671 = vadd.f32 %v669, %v670
        %s672 = vtos %v671
        %v673 = vmul.f32 %v556, %v597
        %v674 = vmul.f32 %v557, %v597
        %v675 = vmul.f32 %v558, %v598
        %v676 = vmul.f32 %v559, %v598
        %v677 = vmul.f32 %v560, %v599
        %v678 = vmul.f32 %v561, %v599
        %v679 = vmul.f32 %v562, %v600
        %v680 = vmul.f32 %v563, %v600
        %v681 = vadd.f32 %v673, %v674
        %v682 = vadd.f32 %v681, %v675
        %v683 = vadd.f32 %v682, %v676
        %v684 = vadd.f32 %v683, %v677
        %v685 = vadd.f32 %v684, %v678
        %v686 = vadd.f32 %v685, %v679
        %v687 = vadd.f32 %v686, %v680
        %688 = vadd.xlane.f32.xlu0 %v687
        %v689 = vpop.xlane.xlu0 %688
        %v690 = vrot.slane %v689, 4
        %v691 = vadd.f32 %v689, %v690
        %v692 = vrot.slane %v691, 2
        %v693 = vadd.f32 %v691, %v692
        %v694 = vrot.slane %v693, 1
        %v695 = vadd.f32 %v693, %v694
        %s696 = vtos %v695
        %v697 = vld [vmem:[#allocation5] sm:$0x3]
        %v699 = vlaneseq
        %v700 = vshrl.u32 %v699, 7
        %v701 = vsub.s32 0, %v700
        %v702 = vrot.slane %v697, %v701
        %v703 = vlaneseq
        %v704 = vshrl.u32 %v703, 7
        %v705 = vsub.s32 1, %v704
        %v706 = vrot.slane %v697, %v705
        %vm709 = vcmask 1040384
        %v710 = vsel %vm709, %v702, 0.0
        %v711 = vsel %vm709, %v706, 0.0
        %v712 = vadd.f32 %v710, %v711
        %713 = vadd.xlane.f32.xlu0 %v712
        %v714 = vpop.xlane.xlu0 %713
        %v715 = vrot.slane %v714, 4
        %v716 = vadd.f32 %v714, %v715
        %v717 = vrot.slane %v716, 2
        %v718 = vadd.f32 %v716, %v717
        %v719 = vrot.slane %v718, 1
        %v720 = vadd.f32 %v718, %v719
        %s721 = vtos %v720
        %v722 = vld [vmem:[#allocation4] sm:$0x3]
        %v724 = vlaneseq
        %v725 = vshrl.u32 %v724, 7
        %v726 = vsub.s32 0, %v725
        %v727 = vrot.slane %v722, %v726
        %v728 = vlaneseq
        %v729 = vshrl.u32 %v728, 7
        %v730 = vsub.s32 1, %v729
        %v731 = vrot.slane %v722, %v730
        %v734 = vsel %vm709, %v727, 0.0
        %v735 = vsel %vm709, %v731, 0.0
        %v736 = vadd.f32 %v734, %v735
        %737 = vadd.xlane.f32.xlu0 %v736
        %v738 = vpop.xlane.xlu0 %737
        %v739 = vrot.slane %v738, 4
        %v740 = vadd.f32 %v738, %v739
        %v741 = vrot.slane %v740, 2
        %v742 = vadd.f32 %v740, %v741
        %v743 = vrot.slane %v742, 1
        %v744 = vadd.f32 %v742, %v743
        %s745 = vtos %v744
        %v746 = vlaneseq
        %v747 = vand.u32 %v746, 127
        %vm748 = vcmp.eq.s32.totalorder %v747, 0
        %v749 = vstv %s624
        %v750 = vsel %vm748, %v749, 0.0
        %vm751 = vcmp.eq.s32.totalorder %v747, 1
        %v752 = vstv %s648
        %v753 = vsel %vm751, %v752, 0.0
        %v754 = vadd.f32 %v750, %v753
        %vm755 = vcmp.eq.s32.totalorder %v747, 2
        %v756 = vstv %s672
        %v757 = vsel %vm755, %v756, 0.0
        %v758 = vadd.f32 %v754, %v757
        %vm759 = vcmp.eq.s32.totalorder %v747, 3
        %v760 = vstv %s696
        %v761 = vsel %vm759, %v760, 0.0
        %v762 = vadd.f32 %v758, %v761
        %vm763 = vcmp.eq.s32.totalorder %v747, 4
        %v764 = vstv %s721
        %v765 = vsel %vm763, %v764, 0.0
        %v766 = vadd.f32 %v762, %v765
        %vm767 = vcmp.eq.s32.totalorder %v747, 5
        %v768 = vstv %s745
        %v769 = vsel %vm767, %v768, 0.0
        %v770 = vadd.f32 %v766, %v769
        %vm771 = vcmask 57344
        %772 = vst.msk [vmem:[%s326] sm:$0x1] %vm771, %v770
      $region44: #{three_part_loss_forward.1} parent=35 // pred_fallthru
        _
      %p773 = scmp.lt.s32.totalorder %s19, 1
      %s774 = scalar_select %p773, %s19, 1
      %s775 = scalar_lea.vmem %s4, %s774
      // Predicated region
      $region45: #{three_part_loss_forward.1} parent=35 // pred_check
        %p776 = pneg %p157
      $region46: #{three_part_loss_forward.1} parent=35 // pred_check_branch
        %778 = sbr.rel (%p776) target = $region48
      $region47: #{three_part_loss_forward.1} parent=35 // pred_region
        _
      $region48: #{three_part_loss_forward.1} parent=35 // pred_fallthru
        _
    $region36: #{three_part_loss_forward.1} parent=5 // pred_fallthru
      _
    %p779 = scmp.le.s32.totalorder 2, %s10
    // Predicated region
    $region49: #{three_part_loss_forward.1} parent=5 // pred_check
      %p780 = pneg %p779
    $region50: #{three_part_loss_forward.1} parent=5 // pred_check_branch
      %782 = sbr.rel (%p780) target = $region52
    $region51: #{three_part_loss_forward.1} parent=5 // pred_region
      %s783 = ssub.s32 %s10, 2
      // Predicated region
      $region53: #{three_part_loss_forward.1} parent=51 // pred_check
        %p784 = pneg %p163
      $region54: #{three_part_loss_forward.1} parent=51 // pred_check_branch
        %786 = sbr.rel (%p784) target = $region56
      $region55: #{three_part_loss_forward.1} parent=51 // pred_region
        %p787 = scmp.lt.s32.totalorder %s21, 1
        %s788 = scalar_select %p787, %s21, 1
        %s789 = scalar_lea.vmem %s4, %s788
      $region56: #{three_part_loss_forward.1} parent=51 // pred_fallthru
        _
    $region52: #{three_part_loss_forward.1} parent=5 // pred_fallthru
      _
  $region6: #{three_part_loss_forward.1} parent=0 // loop_footer
    %s14 = sadd.s32 1, %s10
  $region7: #{three_part_loss_forward.1} parent=0 // loop_footer_branch
    %9 = sbr.rel target = $region3
  $region8: #{three_part_loss_forward.1} parent=0 // loop_exit
    _

</llo_original>
